<compile_context>
chip_gen: v7x
topology: tpu7x:2x2x1
jax: 0.10.0
libtpu: 0.0.40
codegen_flags: <defaults>
</compile_context>

<pallas_src>
import functools

import jax
import jax.numpy as jnp
from jax.experimental import pallas as pl
from jax.experimental.pallas import tpu as pltpu


def _static_pow(t, gamma):
    """t ** gamma with gamma a static Python float.

    Integer / half-integer exponents are unrolled into VPU multiplies (plus a
    single EUP sqrt) instead of exp(gamma * log(t)) (two EUP transcendentals).
    Matches torch.pow semantics for t < 0 (NaN for fractional exponents).
    """
    g = float(gamma)
    if g == int(g) and g >= 0:
        n = int(g)
        if n == 0:
            return jnp.ones_like(t)
        out = t
        for _ in range(n - 1):
            out = out * t
        return out
    if (2.0 * g) == int(2.0 * g) and g > 0:
        # Half-integer exponent: t ** floor(g) * sqrt(t).
        out = jnp.sqrt(t)
        for _ in range(int(g)):
            out = out * t
        return out
    return jnp.power(t, g)


def _bam_kernel(x_ref, o_ref, *, gamma):
    # x_ref: (TB, 3, TR, L) tile; o_ref: (TB, 1, TR, L) tile.
    r = x_ref[:, 0, :, :]
    g = x_ref[:, 1, :, :]
    b = x_ref[:, 2, :, :]
    v = jnp.maximum(r, jnp.maximum(g, b))      # V channel of HSV = max(R, G, B)
    t = (1.0 - v).astype(jnp.float32)          # do the power in f32
    o_ref[:, 0, :, :] = _static_pow(t, gamma).astype(o_ref.dtype)


# Double-buffered (in + out) VMEM bytes targeted per grid step. 8 MiB fits the
# scoped-VMEM defaults of every generation (v5e 16 MiB, v6e 32 MiB, v7x 32 MiB)
# with headroom, while being large enough to reach ~85% of HBM roofline.
_VMEM_TILE_BUDGET = 8 * 1024 * 1024


def _canonical_spatial(H, W):
    """Fold tiny widths into a lane-dense (R, L) relabelling with L = 128."""
    if W >= 128 or (H * W) % 128 != 0:
        return H, W
    return (H * W) // 128, 128


def _choose_tiles(B, R, L, itemsize):
    """Pick (TB, TR) so 2 * (3 in + 1 out) * TB * TR * L * itemsize <= budget."""
    per_row = 2 * 4 * L * itemsize          # double-buffered bytes per spatial row
    rows = max(1, _VMEM_TILE_BUDGET // per_row)
    if rows >= R:
        TR = R                               # full spatial extent fits
        per_img = per_row * R
        TB = int(max(1, min(B, _VMEM_TILE_BUDGET // max(per_img, 1))))
    else:
        TR = max(8, (rows // 8) * 8)         # f32 sublane rule: multiple of 8
        TB = 1
    return TB, TR


def brightness_attention_map(image: jax.Array, gamma: float = 2.5,
                             denoise_ksize=None) -> jax.Array:
    """image: [B, 3, H, W] float in [0, 1]  ->  [B, 1, H, W] BAM prior."""
    # TODO(synk): denoise_ksize (median blur) path not implemented; module default is None.
    assert denoise_ksize is None, "median-blur denoise path not implemented"
    B, C, H, W = image.shape
    assert C == 3, "expects RGB channel-first input"

    R, L = _canonical_spatial(H, W)
    x = image.reshape(B, C, R, L)            # row-major relabel of spatial dims (free)
    TB, TR = _choose_tiles(B, R, L, image.dtype.itemsize)

    kernel = functools.partial(_bam_kernel, gamma=gamma)
    n_pix = B * H * W

    out = pl.pallas_call(
        kernel,
        out_shape=jax.ShapeDtypeStruct((B, 1, R, L), image.dtype),
        grid_spec=pltpu.PrefetchScalarGridSpec(
            num_scalar_prefetch=0,
            grid=(pl.cdiv(B, TB), pl.cdiv(R, TR)),
            in_specs=[
                pl.BlockSpec((TB, C, TR, L), lambda bi, ri: (bi, 0, ri, 0)),
            ],
            out_specs=pl.BlockSpec((TB, 1, TR, L), lambda bi, ri: (bi, 0, ri, 0)),
        ),
        compiler_params=pltpu.CompilerParams(
            dimension_semantics=("parallel", "parallel"),
        ),
        cost_estimate=pl.CostEstimate(
            flops=6 * n_pix,                  # 2 max + 1 sub + ~3 pow muls per pixel
            transcendentals=n_pix,            # one sqrt per pixel (gamma = 2.5)
            bytes_accessed=4 * n_pix * image.dtype.itemsize,
        ),
    )(x)
    return out.reshape(B, 1, H, W)


if __name__ == "__main__":
    key = jax.random.PRNGKey(0)
    B, C, H, W = 2, 3, 16, 16
    x = jax.random.uniform(key, (B, C, H, W), dtype=jnp.float32)  # RGB in [0, 1]

    bam = brightness_attention_map(x, gamma=2.5)
    bam = jax.block_until_ready(bam)

    # Reference check in plain JAX.
    v_ref = jnp.max(x, axis=1, keepdims=True)
    bam_ref = jnp.power(1.0 - v_ref, 2.5)
    assert bam.shape == (B, 1, H, W)
    assert jnp.allclose(bam, bam_ref, atol=1e-5, rtol=1e-5)

    print("KERNEL_OK")
</pallas_src>

<mosaic_0001>
module attributes {stable_mosaic.version = 11 : i64} {
  func.func @_bam_kernel(%arg0: i32, %arg1: i32, %arg2: memref<2x3x2x128xf32, #tpu.memory_space<vmem>>, %arg3: memref<2x1x2x128xf32, #tpu.memory_space<vmem>>) attributes {dimension_semantics = [#tpu.dimension_semantics<parallel>, #tpu.dimension_semantics<parallel>], iteration_bounds = array<i64: 1, 1>, scalar_prefetch = 0 : i64, scratch_operands = 0 : i64, tpu.core_type = #tpu.core_type<tc>, window_params = [{transform_indices = @transform_0, window_bounds = array<i64: 2, 3, 2, 128>}, {transform_indices = @transform_1, window_bounds = array<i64: 2, 1, 2, 128>}]} {
    %c0 = arith.constant 0 : index
    %c0_0 = arith.constant 0 : index
    %c0_1 = arith.constant 0 : index
    %c0_2 = arith.constant 0 : index
    %0 = vector.load %arg2[%c0, %c0_0, %c0_1, %c0_2] : memref<2x3x2x128xf32, #tpu.memory_space<vmem>>, vector<2x1x2x128xf32>
    %1 = vector.shape_cast %0 : vector<2x1x2x128xf32> to vector<2x2x128xf32>
    %c0_3 = arith.constant 0 : index
    %c1 = arith.constant 1 : index
    %c0_4 = arith.constant 0 : index
    %c0_5 = arith.constant 0 : index
    %2 = vector.load %arg2[%c0_3, %c1, %c0_4, %c0_5] : memref<2x3x2x128xf32, #tpu.memory_space<vmem>>, vector<2x1x2x128xf32>
    %3 = vector.shape_cast %2 : vector<2x1x2x128xf32> to vector<2x2x128xf32>
    %c0_6 = arith.constant 0 : index
    %c2 = arith.constant 2 : index
    %c0_7 = arith.constant 0 : index
    %c0_8 = arith.constant 0 : index
    %4 = vector.load %arg2[%c0_6, %c2, %c0_7, %c0_8] : memref<2x3x2x128xf32, #tpu.memory_space<vmem>>, vector<2x1x2x128xf32>
    %5 = vector.shape_cast %4 : vector<2x1x2x128xf32> to vector<2x2x128xf32>
    %6 = arith.maximumf %3, %5 : vector<2x2x128xf32>
    %7 = arith.maximumf %1, %6 : vector<2x2x128xf32>
    %cst = arith.constant 1.000000e+00 : f32
    %8 = vector.broadcast %cst : f32 to vector<2x2x128xf32>
    %9 = arith.subf %8, %7 : vector<2x2x128xf32>
    %10 = math.sqrt %9 : vector<2x2x128xf32>
    %11 = arith.mulf %10, %9 : vector<2x2x128xf32>
    %12 = arith.mulf %11, %9 : vector<2x2x128xf32>
    %c0_9 = arith.constant 0 : index
    %c0_10 = arith.constant 0 : index
    %c0_11 = arith.constant 0 : index
    %c0_12 = arith.constant 0 : index
    %13 = vector.load %arg3[%c0_9, %c0_10, %c0_11, %c0_12] : memref<2x1x2x128xf32, #tpu.memory_space<vmem>>, vector<2x1x2x128xf32>
    %14 = vector.shape_cast %13 : vector<2x1x2x128xf32> to vector<2x2x128xf32>
    %15 = vector.shape_cast %12 : vector<2x2x128xf32> to vector<2x1x2x128xf32>
    tpu.vector_store %arg3[%c0_9, %c0_10, %c0_11, %c0_12], %15 {strides = array<i32>} : memref<2x1x2x128xf32, #tpu.memory_space<vmem>>, vector<2x1x2x128xf32>,
    return
  }
  func.func @transform_0(%arg0: i32, %arg1: i32) -> (i32, i32, i32, i32) {
    %c0_i32 = arith.constant 0 : i32
    %c0_i32_0 = arith.constant 0 : i32
    %c0_i32_1 = arith.constant 0 : i32
    return %arg0, %c0_i32, %arg1, %c0_i32_0 : i32, i32, i32, i32
  }
  func.func @transform_1(%arg0: i32, %arg1: i32) -> (i32, i32, i32, i32) {
    %c0_i32 = arith.constant 0 : i32
    %c0_i32_0 = arith.constant 0 : i32
    %c0_i32_1 = arith.constant 0 : i32
    return %arg0, %c0_i32, %arg1, %c0_i32_0 : i32, i32, i32, i32
  }
}

</mosaic_0001>

<llo_original>
// kernel: tpu_custom_call.1
$region0: #{tpu_custom_call.1}
  #allocation0 [shape = 'u32[]', space=smem, size = 0x4, offset = 0x4, fixed_abs, tag = 'smem constant byte address 0x4 - core index']
  #allocation1 [shape = 'u32[144,128]{1,0:T(1,128)}', space=vmem, size = 0x12000, scoped, tag = 'internal scratch']
  %s0 = inlined_call_operand.hbm [shape: f32[2,3,2,128], index: 0, kind: input, shape index: {}]
  %s1 = inlined_call_operand.hbm [shape: f32[2,1,2,128], index: 1, kind: output, shape index: {}]
  %s2 = sld [smem:[#allocation0]]
  $region18: #{tpu_custom_call.1} parent=0
    _
  %s4 = ssub.s32 1, %s2
  %s5 = scalar_select 0, %s4, %s2
  $region1: #{tpu_custom_call.1} parent=0
    #allocation2 [shape = 'u8[6144]{0}', space=vmem, size = 0x1800, scoped, tag = 'input window, operand 0, single buffered']
    #allocation3 [shape = 's32[1]{0}', space=sflag, size = 0x4, scoped, tag = 'scoped memory for tpu_custom_call.1']
    #allocation4 [shape = 's32[1]{0}', space=sflag, size = 0x4, scoped, tag = 'scoped memory for tpu_custom_call.1']
    #allocation5 [shape = 'u8[2048]{0}', space=vmem, size = 0x800, scoped, tag = 'output window, operand 0, single buffered']
    %6 = vsyncpa [#allocation3], 0
    %7 = vsyncpa [#allocation4], 0
    // Predicated region
    $region2: #{tpu_custom_call.1} parent=1 // pred_check
      _
    $region3: #{tpu_custom_call.1} parent=1 // pred_check_branch
      %9 = sbr.rel (0) target = $region5
    $region4: #{tpu_custom_call.1} parent=1 // pred_region
      %s11 = ssub.s32 192, 192
      %12 = vsyncadd [#allocation3], %s11
      %s13 = sshll.u32 [#allocation2], 4
      %s14 = int_to_ptr.vmem [resolvable:$true] %s13
      %19 = dma.hbm_to_vmem [thread:$0]  %s0, 192, %s14, [#allocation3], 32, 32, 2
    $region5: #{tpu_custom_call.1} parent=1 // pred_fallthru
      _
    // Predicated region
    $region6: #{tpu_custom_call.1} parent=1 // pred_check
      _
    $region7: #{tpu_custom_call.1} parent=1 // pred_check_branch
      %21 = sbr.rel (0) target = $region9
    $region8: #{tpu_custom_call.1} parent=1 // pred_region
      %22 = dma.done [#allocation3], 192
    $region9: #{tpu_custom_call.1} parent=1 // pred_fallthru
      _
    %v23 = vld [vmem:[#allocation2] sm:$0x3]
    %v24 = vld [vmem:[#allocation2 + $0x6] sm:$0x3]
    %s25 = scalar_lea.vmem [#allocation2], 2
    %v26 = vld [vmem:[%s25] sm:$0x3]
    %v27 = vld [vmem:[%s25 + $0x6] sm:$0x3]
    %s28 = scalar_lea.vmem [#allocation2], 4
    %v29 = vld [vmem:[%s28] sm:$0x3]
    %v30 = vld [vmem:[%s28 + $0x6] sm:$0x3]
    %v31 = vmax.f32 %v26, %v29
    %v32 = vmax.f32 %v27, %v30
    %v33 = vmax.f32 %v23, %v31
    %v34 = vmax.f32 %v24, %v32
    %v35 = vsub.f32 1.0, %v33
    %v36 = vsub.f32 1.0, %v34
    %v37 = vrsqrt.pop %v35
    %v38 = vmul.f32 %v35, %v37
    %vm39 = vcmp.eq.f32.partialorder %v35, inf
    %v40 = vsel %vm39, %v35, %v38
    %vm41 = vcmp.eq.f32.partialorder %v35, 0.0
    %v42 = vand.u32 %v35, 2147483648
    %v43 = vsel %vm41, %v42, %v40
    %v44 = vrsqrt.pop %v36
    %v45 = vmul.f32 %v36, %v44
    %vm46 = vcmp.eq.f32.partialorder %v36, inf
    %v47 = vsel %vm46, %v36, %v45
    %vm48 = vcmp.eq.f32.partialorder %v36, 0.0
    %v49 = vand.u32 %v36, 2147483648
    %v50 = vsel %vm48, %v49, %v47
    %v51 = vmul.f32 %v43, %v35
    %v52 = vmul.f32 %v50, %v36
    %v53 = vmul.f32 %v51, %v35
    %v54 = vmul.f32 %v52, %v36
    %55 = vst [vmem:[#allocation5] sm:$0x3] %v53
    %56 = vst [vmem:[#allocation5 + $0x2] sm:$0x3] %v54
    // Predicated region
    $region10: #{tpu_custom_call.1} parent=1 // pred_check
      _
    $region11: #{tpu_custom_call.1} parent=1 // pred_check_branch
      %58 = sbr.rel (0) target = $region13
    $region12: #{tpu_custom_call.1} parent=1 // pred_region
      %s60 = ssub.s32 64, 64
      %61 = vsyncadd [#allocation4], %s60
      %s62 = sshll.u32 [#allocation5], 4
      %s63 = int_to_ptr.vmem [resolvable:$true] %s62
      %68 = dma.vmem_to_hbm [thread:$0]  %s63, 64, %s1, [#allocation4], 32, 32, 2
    $region13: #{tpu_custom_call.1} parent=1 // pred_fallthru
      _
    // Predicated region
    $region14: #{tpu_custom_call.1} parent=1 // pred_check
      _
    $region15: #{tpu_custom_call.1} parent=1 // pred_check_branch
      %70 = sbr.rel (0) target = $region17
    $region16: #{tpu_custom_call.1} parent=1 // pred_region
      %71 = dma.done [#allocation4], 64
    $region17: #{tpu_custom_call.1} parent=1 // pred_fallthru
      _
    %72 = vsyncpa [#allocation3], 1
    %73 = vsyncpa [#allocation4], 1

</llo_original>
